<compile_context>
chip_gen: v7x
topology: tpu7x:2x2x1
jax: 0.10.0
libtpu: 0.0.40
codegen_flags: <defaults>
</compile_context>

<pallas_src>
import functools

import jax
import jax.numpy as jnp
from jax.experimental import pallas as pl
from jax.experimental.pallas import tpu as pltpu


def _round_up(a, b):
    return (a + b - 1) // b * b


def _pick_tile_m(M, Kc, Cout):
    """Rows per grid step.

    Large tiles amortize the ~0.35us per-grid-step overhead; the cap keeps the
    double-buffered blocks well under v7x's 64 MiB VMEM (v5e/v6e have 128 MiB);
    when M allows we keep >= 2 tiles so v7x's two TensorCores both get work.
    """
    # Conservative per-row VMEM estimate (lane-padded, double-buffered):
    # patches f32 + y bf16 + out f32.
    per_row = 2 * (4 * _round_up(Kc, 128) + 6 * _round_up(Cout, 128))
    budget = 20 * 1024 * 1024
    cap = max(128, budget // per_row // 128 * 128)
    tile = max(128, min(2048, cap, _round_up(M, 128)))
    if M > 128 and -(-M // tile) < 2:
        tile = max(128, _round_up(-(-M // 2), 128))
    return tile


def _conv_stats_kernel(p_ref, w_ref, y_ref, stats_ref, *, m_total, tile_m):
    """Per M-tile: im2col matmul (27 offsets folded into the contraction) plus
    per-tile BN partial statistics.

    p_ref:     [tile_m, 27*Cin] f32 patches
    w_ref:     [27*Cin, Cout]   f32 folded conv weight
    y_ref:     [tile_m, Cout]   bf16 conv output (narrow HBM intermediate)
    stats_ref: [8, Cout]        f32, row 0 = sum(y), row 1 = sum(y*y)
    """
    y = jnp.dot(p_ref[...], w_ref[...], preferred_element_type=jnp.float32)
    y_ref[...] = y.astype(y_ref.dtype)

    # Stats in f32 from the pre-cast matmul result; mask rows past the true M
    # so a ragged last tile cannot pollute the statistics.
    rem = m_total - pl.program_id(0) * tile_m
    rows = jax.lax.broadcasted_iota(jnp.int32, y.shape, 0)
    ym = jnp.where(rows < rem, y, 0.0)
    s = jnp.sum(ym, axis=0, keepdims=True)
    sq = jnp.sum(ym * ym, axis=0, keepdims=True)
    srows = jax.lax.broadcasted_iota(jnp.int32, stats_ref.shape, 0)
    stats_ref[...] = jnp.where(srows == 0, s, jnp.where(srows == 1, sq, 0.0))


def _bn_elu_kernel(y_ref, scale_ref, shift_ref, o_ref):
    """Per M-tile: fused batch-norm (precomputed scale/shift) + ELU(alpha=1).

    bf16 is only the storage format; all math is f32 (v5e has no bf16 VPU/EUP).
    """
    z = y_ref[...].astype(jnp.float32) * scale_ref[...] + shift_ref[...]
    o_ref[...] = jnp.where(z > 0, z, jnp.expm1(z)).astype(o_ref.dtype)


def downsample_pallas(x, weight, gamma, beta, eps=1e-5):
    """x: [N, Cin, D, H, W] f32; weight: [27, Cin, Cout]; gamma/beta: [Cout]."""
    N, Cin, D, H, W = x.shape
    K, _, Cout = weight.shape
    assert K == 27

    # conv: kernel 3, stride 2, pad 1 (dense-grid stand-in for the sparse conv).
    Do, Ho, Wo = (D - 1) // 2 + 1, (H - 1) // 2 + 1, (W - 1) // 2 + 1

    # im2col glue: channels-last once, then 27 pure stride-2 slices, k-major /
    # Cin-minor so columns match weight.reshape(27*Cin, Cout).
    x_cl = jnp.transpose(x.astype(jnp.float32), (0, 2, 3, 4, 1))      # NDHWC
    xp = jnp.pad(x_cl, ((0, 0), (1, 1), (1, 1), (1, 1), (0, 0)))
    cols = []
    for kd in range(3):
        for kh in range(3):
            for kw in range(3):
                p = xp[:, kd:kd + 2 * Do:2, kh:kh + 2 * Ho:2, kw:kw + 2 * Wo:2, :]
                cols.append(p.reshape(-1, Cin))
    patches = jnp.concatenate(cols, axis=1)                           # [M, 27*Cin]
    M, Kc = patches.shape

    w2d = weight.astype(jnp.float32).reshape(Kc, Cout)                # no padding

    tile_m = _pick_tile_m(M, Kc, Cout)
    nt = -(-M // tile_m)

    cparams = pltpu.CompilerParams(
        dimension_semantics=("parallel",),
        vmem_limit_bytes=32 * 1024 * 1024)

    # Pass 1: conv matmul + per-tile BN partial sums. y is stored narrow
    # ([M, Cout]) and bf16 to minimize the inter-pass HBM round trip.
    y_bf, stats = pl.pallas_call(
        functools.partial(_conv_stats_kernel, m_total=M, tile_m=tile_m),
        out_shape=(jax.ShapeDtypeStruct((M, Cout), jnp.bfloat16),
                   jax.ShapeDtypeStruct((nt * 8, Cout), jnp.float32)),
        grid_spec=pltpu.PrefetchScalarGridSpec(
            num_scalar_prefetch=0,
            grid=(nt,),
            in_specs=[
                pl.BlockSpec((tile_m, Kc), lambda i: (i, 0)),
                pl.BlockSpec((Kc, Cout), lambda i: (0, 0)),
            ],
            out_specs=[
                pl.BlockSpec((tile_m, Cout), lambda i: (i, 0)),
                pl.BlockSpec((8, Cout), lambda i: (i, 0)),
            ],
        ),
        compiler_params=cparams,
    )(patches, w2d)

    # Tiny global BN combine in f32 (training-mode stats over all M rows).
    stats = stats.reshape(nt, 8, Cout)
    mean = jnp.sum(stats[:, 0, :], axis=0) / M
    var = jnp.maximum(jnp.sum(stats[:, 1, :], axis=0) / M - mean * mean, 0.0)
    invstd = jax.lax.rsqrt(var + eps)
    g = gamma.astype(jnp.float32) * invstd
    scale = g.reshape(1, Cout)
    shift = (beta.astype(jnp.float32) - mean * g).reshape(1, Cout)

    # Pass 2: normalize + affine + ELU, emitting the final un-padded (M, Cout).
    out2d = pl.pallas_call(
        _bn_elu_kernel,
        out_shape=jax.ShapeDtypeStruct((M, Cout), jnp.float32),
        grid_spec=pltpu.PrefetchScalarGridSpec(
            num_scalar_prefetch=0,
            grid=(nt,),
            in_specs=[
                pl.BlockSpec((tile_m, Cout), lambda i: (i, 0)),
                pl.BlockSpec((1, Cout), lambda i: (0, 0)),
                pl.BlockSpec((1, Cout), lambda i: (0, 0)),
            ],
            out_specs=pl.BlockSpec((tile_m, Cout), lambda i: (i, 0)),
        ),
        compiler_params=cparams,
    )(y_bf, scale, shift)

    # Cheap tail: back to NCDHW (small tensor; one fused XLA relayout pass).
    out = out2d.reshape(N, Do, Ho, Wo, Cout)
    return jnp.transpose(out, (0, 4, 1, 2, 3))


def _reference(x, weight, gamma, beta, eps=1e-5):
    """Plain-JAX f32 reference for the correctness check."""
    N, Cin, D, H, W = x.shape
    K, _, Cout = weight.shape
    Do, Ho, Wo = (D - 1) // 2 + 1, (H - 1) // 2 + 1, (W - 1) // 2 + 1
    xp = jnp.pad(x, ((0, 0), (0, 0), (1, 1), (1, 1), (1, 1)))
    patches = []
    for kd in range(3):
        for kh in range(3):
            for kw in range(3):
                p = xp[:, :, kd:kd + 2 * Do:2, kh:kh + 2 * Ho:2, kw:kw + 2 * Wo:2]
                patches.append(jnp.transpose(p, (0, 2, 3, 4, 1)).reshape(-1, Cin))
    patches = jnp.stack(patches)
    y = jnp.einsum('kmc,kco->mo', patches, weight)
    mean = y.mean(0, keepdims=True)
    var = ((y - mean) ** 2).mean(0, keepdims=True)
    y_hat = (y - mean) / jnp.sqrt(var + eps) * gamma[None, :] + beta[None, :]
    y_hat = jnp.where(y_hat > 0, y_hat, jnp.expm1(y_hat))
    return jnp.transpose(y_hat.reshape(N, Do, Ho, Wo, Cout), (0, 4, 1, 2, 3))


if __name__ == "__main__":
    N, Cin, Cout = 2, 4, 8
    D = H = W = 8

    key = jax.random.PRNGKey(0)
    kx, kw, kg, kb = jax.random.split(key, 4)
    x = jax.random.normal(kx, (N, Cin, D, H, W), dtype=jnp.float32)
    # Minkowski conv weight layout: [kernel_volume=27, Cin, Cout], no bias.
    weight = jax.random.normal(kw, (27, Cin, Cout), dtype=jnp.float32) * 0.1
    # BatchNorm affine params (perturbed around the init weight=1, bias=0).
    gamma = 1.0 + 0.1 * jax.random.normal(kg, (Cout,), dtype=jnp.float32)
    beta = 0.1 * jax.random.normal(kb, (Cout,), dtype=jnp.float32)

    out = jax.block_until_ready(downsample_pallas(x, weight, gamma, beta))
    ref = _reference(x, weight, gamma, beta)

    assert out.shape == (N, Cout, 4, 4, 4), out.shape
    max_err = float(jnp.max(jnp.abs(out - ref)))
    # Only numerical difference vs. the f32 reference is the bf16 round trip of
    # the conv intermediate (~2^-9 relative rounding); stats/BN/ELU are f32.
    assert max_err < 3e-2, max_err
    print("KERNEL_OK")
</pallas_src>

<mosaic_0001>
module attributes {stable_mosaic.version = 11 : i64} {
  func.func @_conv_stats_kernel(%arg0: i32, %arg1: memref<128x108xf32, #tpu.memory_space<vmem>>, %arg2: memref<108x8xf32, #tpu.memory_space<vmem>>, %arg3: memref<128x8xbf16, #tpu.memory_space<vmem>>, %arg4: memref<8x8xf32, #tpu.memory_space<vmem>>) attributes {dimension_semantics = [#tpu.dimension_semantics<parallel>], iteration_bounds = array<i64: 1>, scalar_prefetch = 0 : i64, scratch_operands = 0 : i64, tpu.core_type = #tpu.core_type<tc>, window_params = [{transform_indices = @transform_0, window_bounds = array<i64: 128, 108>}, {pipeline_mode = #tpu.pipeline_mode<synchronous>, transform_indices = @transform_1, window_bounds = array<i64: 108, 8>}, {transform_indices = @transform_2, window_bounds = array<i64: 128, 8>}, {transform_indices = @transform_3, window_bounds = array<i64: 8, 8>}]} {
    %c0 = arith.constant 0 : index
    %c0_0 = arith.constant 0 : index
    %0 = vector.load %arg1[%c0, %c0_0] : memref<128x108xf32, #tpu.memory_space<vmem>>, vector<128x108xf32>
    %c0_1 = arith.constant 0 : index
    %c0_2 = arith.constant 0 : index
    %1 = vector.load %arg2[%c0_1, %c0_2] : memref<108x8xf32, #tpu.memory_space<vmem>>, vector<108x8xf32>
    %cst = arith.constant dense<0.000000e+00> : vector<128x8xf32>
    %2 = tpu.matmul %0, %1, %cst {dimension_numbers = #tpu.dot_dimension_numbers<[1], [0], [0], [1], [0, 0, 1, 1], [], []>} : vector<128x108xf32>, vector<108x8xf32>, vector<128x8xf32> -> vector<128x8xf32>
    %3 = arith.truncf %2 : vector<128x8xf32> to vector<128x8xbf16>
    %c0_3 = arith.constant 0 : index
    %c0_4 = arith.constant 0 : index
    %4 = vector.load %arg3[%c0_3, %c0_4] : memref<128x8xbf16, #tpu.memory_space<vmem>>, vector<128x8xbf16>
    tpu.vector_store %arg3[%c0_3, %c0_4], %3 {strides = array<i32>} : memref<128x8xbf16, #tpu.memory_space<vmem>>, vector<128x8xbf16>,
    %c128_i32 = arith.constant 128 : i32
    %5 = arith.muli %arg0, %c128_i32 : i32
    %c128_i32_5 = arith.constant 128 : i32
    %6 = arith.subi %c128_i32_5, %5 : i32
    %7 = tpu.iota {dimensions = array<i32: 0>} : vector<128x8xi32>
    %8 = vector.broadcast %6 : i32 to vector<128x8xi32>
    %9 = arith.cmpi slt, %7, %8 : vector<128x8xi32>
    %cst_6 = arith.constant 0.000000e+00 : f32
    %10 = vector.broadcast %cst_6 : f32 to vector<128x8xf32>
    %11 = arith.select %9, %2, %10 : vector<128x8xi1>, vector<128x8xf32>
    %cst_7 = arith.constant dense<0.000000e+00> : vector<8xf32>
    %12 = vector.multi_reduction <add>, %11, %cst_7 [0] : vector<128x8xf32> to vector<8xf32>
    %13 = vector.shape_cast %12 : vector<8xf32> to vector<1x8xf32>
    %14 = arith.mulf %11, %11 : vector<128x8xf32>
    %cst_8 = arith.constant dense<0.000000e+00> : vector<8xf32>
    %15 = vector.multi_reduction <add>, %14, %cst_8 [0] : vector<128x8xf32> to vector<8xf32>
    %16 = vector.shape_cast %15 : vector<8xf32> to vector<1x8xf32>
    %17 = tpu.iota {dimensions = array<i32: 0>} : vector<8x8xi32>
    %c0_i32 = arith.constant 0 : i32
    %18 = vector.broadcast %c0_i32 : i32 to vector<8x8xi32>
    %19 = arith.cmpi eq, %17, %18 : vector<8x8xi32>
    %c1_i32 = arith.constant 1 : i32
    %20 = vector.broadcast %c1_i32 : i32 to vector<8x8xi32>
    %21 = arith.cmpi eq, %17, %20 : vector<8x8xi32>
    %cst_9 = arith.constant 0.000000e+00 : f32
    %22 = vector.shape_cast %16 : vector<1x8xf32> to vector<1x8xf32>
    %23 = vector.broadcast %22 : vector<1x8xf32> to vector<8x8xf32>
    %24 = vector.broadcast %cst_9 : f32 to vector<8x8xf32>
    %25 = arith.select %21, %23, %24 : vector<8x8xi1>, vector<8x8xf32>
    %26 = vector.shape_cast %13 : vector<1x8xf32> to vector<1x8xf32>
    %27 = vector.broadcast %26 : vector<1x8xf32> to vector<8x8xf32>
    %28 = arith.select %19, %27, %25 : vector<8x8xi1>, vector<8x8xf32>
    %c0_10 = arith.constant 0 : index
    %c0_11 = arith.constant 0 : index
    %29 = vector.load %arg4[%c0_10, %c0_11] : memref<8x8xf32, #tpu.memory_space<vmem>>, vector<8x8xf32>
    tpu.vector_store %arg4[%c0_10, %c0_11], %28 {strides = array<i32>} : memref<8x8xf32, #tpu.memory_space<vmem>>, vector<8x8xf32>,
    return
  }
  func.func @transform_0(%arg0: i32) -> (i32, i32) {
    %c0_i32 = arith.constant 0 : i32
    %c0_i32_0 = arith.constant 0 : i32
    return %arg0, %c0_i32 : i32, i32
  }
  func.func @transform_1(%arg0: i32) -> (i32, i32) {
    %c0_i32 = arith.constant 0 : i32
    %c0_i32_0 = arith.constant 0 : i32
    %c0_i32_1 = arith.constant 0 : i32
    return %c0_i32, %c0_i32_0 : i32, i32
  }
  func.func @transform_2(%arg0: i32) -> (i32, i32) {
    %c0_i32 = arith.constant 0 : i32
    %c0_i32_0 = arith.constant 0 : i32
    return %arg0, %c0_i32 : i32, i32
  }
  func.func @transform_3(%arg0: i32) -> (i32, i32) {
    %c0_i32 = arith.constant 0 : i32
    %c0_i32_0 = arith.constant 0 : i32
    return %arg0, %c0_i32 : i32, i32
  }
}

</mosaic_0001>

<llo_original>
// kernel: tpu_custom_call.1
$region0: #{tpu_custom_call.1}
  #allocation0 [shape = 'u32[]', space=smem, size = 0x4, offset = 0x4, fixed_abs, tag = 'smem constant byte address 0x4 - core index']
  #allocation1 [shape = 'u32[144,128]{1,0:T(1,128)}', space=vmem, size = 0x12000, scoped, tag = 'internal scratch']
  %s0 = inlined_call_operand.vmem [shape: f32[128,108], index: 0, kind: input, shape index: {}]
  %s1 = inlined_call_operand.vmem [shape: f32[108,8], index: 1, kind: input, shape index: {}]
  %s2 = inlined_call_operand.vmem [shape: bf16[128,8], index: 2, kind: output, shape index: {0}]
  %s3 = inlined_call_operand.hbm [shape: f32[8,8], index: 3, kind: output, shape index: {1}]
  %4 = xla_tuple %s2, %s3
  %s5 = sld [smem:[#allocation0]]
  $region26: #{tpu_custom_call.1} parent=0
    _
  %s7 = ssub.s32 1, %s5
  %s8 = scalar_select 0, %s7, %s5
  $region1: #{tpu_custom_call.1} parent=0
    #allocation2 [shape = 'u8[4096]{0}', space=vmem, size = 0x1000, scoped, tag = 'output window, operand 1, single buffered']
    #allocation3 [shape = 's32[1]{0}', space=sflag, size = 0x4, scoped, tag = 'scoped memory for tpu_custom_call.1']
    %9 = vsyncpa [#allocation3], 0
    // Predicated region
    $region2: #{tpu_custom_call.1} parent=1 // pred_check
      _
    $region3: #{tpu_custom_call.1} parent=1 // pred_check_branch
      %11 = sbr.rel (0) target = $region5
    $region4: #{tpu_custom_call.1} parent=1 // pred_region
      _
    $region5: #{tpu_custom_call.1} parent=1 // pred_fallthru
      _
    // Predicated region
    $region6: #{tpu_custom_call.1} parent=1 // pred_check
      _
    $region7: #{tpu_custom_call.1} parent=1 // pred_check_branch
      %13 = sbr.rel (0) target = $region9
    $region8: #{tpu_custom_call.1} parent=1 // pred_region
      _
    $region9: #{tpu_custom_call.1} parent=1 // pred_fallthru
      _
    %v14 = vld [vmem:[%s0] sm:$0xff]
    %v15 = vld [vmem:[%s0 + $0x8] sm:$0xff]
    %v16 = vld [vmem:[%s0 + $0x10] sm:$0xff]
    %v17 = vld [vmem:[%s0 + $0x18] sm:$0xff]
    %v18 = vld [vmem:[%s0 + $0x20] sm:$0xff]
    %v19 = vld [vmem:[%s0 + $0x28] sm:$0xff]
    %v20 = vld [vmem:[%s0 + $0x30] sm:$0xff]
    %v21 = vld [vmem:[%s0 + $0x38] sm:$0xff]
    %v22 = vld [vmem:[%s0 + $0x40] sm:$0xff]
    %v23 = vld [vmem:[%s0 + $0x48] sm:$0xff]
    %v24 = vld [vmem:[%s0 + $0x50] sm:$0xff]
    %v25 = vld [vmem:[%s0 + $0x58] sm:$0xff]
    %v26 = vld [vmem:[%s0 + $0x60] sm:$0xff]
    %v27 = vld [vmem:[%s0 + $0x68] sm:$0xff]
    %v28 = vld [vmem:[%s0 + $0x70] sm:$0xff]
    %v29 = vld [vmem:[%s0 + $0x78] sm:$0xff]
    %v30 = vld [vmem:[%s1] sm:$0xff]
    %v31 = vld [vmem:[%s1 + $0x8] sm:$0xff]
    %v32 = vld [vmem:[%s1 + $0x10] sm:$0xff]
    %v33 = vld [vmem:[%s1 + $0x18] sm:$0xff]
    %v34 = vld [vmem:[%s1 + $0x20] sm:$0xff]
    %v35 = vld [vmem:[%s1 + $0x28] sm:$0xff]
    %v36 = vld [vmem:[%s1 + $0x30] sm:$0xff]
    %v37 = vld [vmem:[%s1 + $0x38] sm:$0xff]
    %v38 = vld [vmem:[%s1 + $0x40] sm:$0xff]
    %v39 = vld [vmem:[%s1 + $0x48] sm:$0xff]
    %v40 = vld [vmem:[%s1 + $0x50] sm:$0xff]
    %v41 = vld [vmem:[%s1 + $0x58] sm:$0xff]
    %v42 = vld [vmem:[%s1 + $0x60] sm:$0xff]
    %v43 = vld [vmem:[%s1 + $0x68] sm:$0xf]
    %vm44 = vcmask 883712
    %v46 = vsel %vm44, %v14, 0
    %v49 = vsel %vm44, %v15, 0
    %v52 = vsel %vm44, %v16, 0
    %v55 = vsel %vm44, %v17, 0
    %v58 = vsel %vm44, %v18, 0
    %v61 = vsel %vm44, %v19, 0
    %v64 = vsel %vm44, %v20, 0
    %v67 = vsel %vm44, %v21, 0
    %v70 = vsel %vm44, %v22, 0
    %v73 = vsel %vm44, %v23, 0
    %v76 = vsel %vm44, %v24, 0
    %v79 = vsel %vm44, %v25, 0
    %v82 = vsel %vm44, %v26, 0
    %v85 = vsel %vm44, %v27, 0
    %v88 = vsel %vm44, %v28, 0
    %v91 = vsel %vm44, %v29, 0
    %vm93 = vcmask 1043456
    %v95 = vsel %vm93, %v43, 0
    %97 = vmatprep.subr.mxu0 0.0
    %98 = vmatpush1.msra.mxu0 %v30
    %99 = vmatprep.subr.mxu0 0.0
    %100 = vmatpush1.msra.mxu0 %v31
    %101 = vmatprep.subr.mxu0 0.0
    %102 = vmatpush1.msra.mxu0 %v32
    %103 = vmatprep.subr.mxu0 0.0
    %104 = vmatpush1.msra.mxu0 %v33
    %105 = vmatprep.subr.mxu0 0.0
    %106 = vmatpush1.msra.mxu0 %v34
    %107 = vmatprep.subr.mxu0 0.0
    %108 = vmatpush1.msra.mxu0 %v35
    %109 = vmatprep.subr.mxu0 0.0
    %110 = vmatpush1.msra.mxu0 %v36
    %111 = vmatprep.subr.mxu0 0.0
    %112 = vmatpush1.msra.mxu0 %v37
    %113 = vmatprep.subr.mxu0 0.0
    %114 = vmatpush1.msra.mxu0 %v38
    %115 = vmatprep.subr.mxu0 0.0
    %116 = vmatpush1.msra.mxu0 %v39
    %117 = vmatprep.subr.mxu0 0.0
    %118 = vmatpush1.msra.mxu0 %v40
    %119 = vmatprep.subr.mxu0 0.0
    %120 = vmatpush1.msra.mxu0 %v41
    %121 = vmatprep.subr.mxu0 0.0
    %122 = vmatpush1.msra.mxu0 %v42
    %123 = vmatprep.subr.mxu0 0.0
    %124 = vmatpush1.msra.mxu0 %v95
    %125 = vmatprep.subr.mxu0 0.0
    %126 = vmatpush1.msra.mxu0 0.0
    %127 = vmatprep.subr.mxu0 0.0
    %128 = vmatpush1.msra.mxu0 0.0
    %129 = vmatprep.subr.mxu0 0.0
    %130 = vmatpush1.msra.mxu0 0.0
    %131 = vmatprep.subr.mxu0 0.0
    %132 = vmatpush1.msra.mxu0 0.0
    %133 = vmatprep.subr.mxu0 0.0
    %134 = vmatpush1.msra.mxu0 0.0
    %135 = vmatprep.subr.mxu0 0.0
    %136 = vmatpush1.msra.mxu0 0.0
    %137 = vmatprep.subr.mxu0 0.0
    %138 = vmatpush1.msra.mxu0 0.0
    %139 = vmatprep.subr.mxu0 0.0
    %140 = vmatpush1.msra.mxu0 0.0
    %141 = vmatprep.subr.mxu0 0.0
    %142 = vmatpush1.msra.mxu0 0.0
    %143 = vmatprep.subr.mxu0 0.0
    %144 = vmatpush1.msra.mxu0 0.0
    %145 = vmatprep.subr.mxu0 0.0
    %146 = vmatpush1.msra.mxu0 0.0
    %147 = vmatprep.subr.mxu0 0.0
    %148 = vmatpush1.msra.mxu0 0.0
    %149 = vmatprep.subr.mxu0 0.0
    %150 = vmatpush1.msra.mxu0 0.0
    %151 = vmatprep.subr.mxu0 0.0
    %152 = vmatpush1.msra.mxu0 0.0
    %153 = vmatprep.subr.mxu0 0.0
    %154 = vmatpush1.msra.mxu0 0.0
    %155 = vmatprep.subr.mxu0 0.0
    %156 = vmatpush1.msra.mxu0 0.0
    %157 = vmatprep.subr.mxu0 0.0
    %158 = vmatpush1.msra.mxu0 0.0
    %159 = vmatprep.subr.mxu0 0.0
    %160 = vmatpush1.msra.mxu0 0.0
    %161 = vmatprep.mubr.f32.mxu0 0.0
    %162 = vmatmul.mubr.f32.gmra.mrb[0].mxu0 %v46
    %v163 = vpop.f32.mrb[0].mxu0
    %v164 = vadd.f32 0.0, %v163
    %v165 = vpop.f32.mrb[0].mxu0
    %166 = vmatprep.mubr.f32.mxu0 0.0
    %167 = vmatmul.mubr.f32.gmra.mrb[0].mxu0 %v49
    %v168 = vpop.f32.mrb[0].mxu0
    %v169 = vadd.f32 0.0, %v168
    %v170 = vpop.f32.mrb[0].mxu0
    %171 = vmatprep.mubr.f32.mxu0 0.0
    %172 = vmatmul.mubr.f32.gmra.mrb[0].mxu0 %v52
    %v173 = vpop.f32.mrb[0].mxu0
    %v174 = vadd.f32 0.0, %v173
    %v175 = vpop.f32.mrb[0].mxu0
    %176 = vmatprep.mubr.f32.mxu0 0.0
    %177 = vmatmul.mubr.f32.gmra.mrb[0].mxu0 %v55
    %v178 = vpop.f32.mrb[0].mxu0
    %v179 = vadd.f32 0.0, %v178
    %v180 = vpop.f32.mrb[0].mxu0
    %181 = vmatprep.mubr.f32.mxu0 0.0
    %182 = vmatmul.mubr.f32.gmra.mrb[0].mxu0 %v58
    %v183 = vpop.f32.mrb[0].mxu0
    %v184 = vadd.f32 0.0, %v183
    %v185 = vpop.f32.mrb[0].mxu0
    %186 = vmatprep.mubr.f32.mxu0 0.0
    %187 = vmatmul.mubr.f32.gmra.mrb[0].mxu0 %v61
    %v188 = vpop.f32.mrb[0].mxu0
    %v189 = vadd.f32 0.0, %v188
    %v190 = vpop.f32.mrb[0].mxu0
    %191 = vmatprep.mubr.f32.mxu0 0.0
    %192 = vmatmul.mubr.f32.gmra.mrb[0].mxu0 %v64
    %v193 = vpop.f32.mrb[0].mxu0
    %v194 = vadd.f32 0.0, %v193
    %v195 = vpop.f32.mrb[0].mxu0
    %196 = vmatprep.mubr.f32.mxu0 0.0
    %197 = vmatmul.mubr.f32.gmra.mrb[0].mxu0 %v67
    %v198 = vpop.f32.mrb[0].mxu0
    %v199 = vadd.f32 0.0, %v198
    %v200 = vpop.f32.mrb[0].mxu0
    %201 = vmatprep.mubr.f32.mxu0 0.0
    %202 = vmatmul.mubr.f32.gmra.mrb[0].mxu0 %v70
    %v203 = vpop.f32.mrb[0].mxu0
    %v204 = vadd.f32 0.0, %v203
    %v205 = vpop.f32.mrb[0].mxu0
    %206 = vmatprep.mubr.f32.mxu0 0.0
    %207 = vmatmul.mubr.f32.gmra.mrb[0].mxu0 %v73
    %v208 = vpop.f32.mrb[0].mxu0
    %v209 = vadd.f32 0.0, %v208
    %v210 = vpop.f32.mrb[0].mxu0
    %211 = vmatprep.mubr.f32.mxu0 0.0
    %212 = vmatmul.mubr.f32.gmra.mrb[0].mxu0 %v76
    %v213 = vpop.f32.mrb[0].mxu0
    %v214 = vadd.f32 0.0, %v213
    %v215 = vpop.f32.mrb[0].mxu0
    %216 = vmatprep.mubr.f32.mxu0 0.0
    %217 = vmatmul.mubr.f32.gmra.mrb[0].mxu0 %v79
    %v218 = vpop.f32.mrb[0].mxu0
    %v219 = vadd.f32 0.0, %v218
    %v220 = vpop.f32.mrb[0].mxu0
    %221 = vmatprep.mubr.f32.mxu0 0.0
    %222 = vmatmul.mubr.f32.gmra.mrb[0].mxu0 %v82
    %v223 = vpop.f32.mrb[0].mxu0
    %v224 = vadd.f32 0.0, %v223
    %v225 = vpop.f32.mrb[0].mxu0
    %226 = vmatprep.mubr.f32.mxu0 0.0
    %227 = vmatmul.mubr.f32.gmra.mrb[0].mxu0 %v85
    %v228 = vpop.f32.mrb[0].mxu0
    %v229 = vadd.f32 0.0, %v228
    %v230 = vpop.f32.mrb[0].mxu0
    %231 = vmatprep.mubr.f32.mxu0 0.0
    %232 = vmatmul.mubr.f32.gmra.mrb[0].mxu0 %v88
    %v233 = vpop.f32.mrb[0].mxu0
    %v234 = vadd.f32 0.0, %v233
    %v235 = vpop.f32.mrb[0].mxu0
    %236 = vmatprep.mubr.f32.mxu0 0.0
    %237 = vmatmul.mubr.f32.gmra.mrb[0].mxu0 %v91
    %v238 = vpop.f32.mrb[0].mxu0
    %v239 = vadd.f32 0.0, %v238
    %v240 = vpop.f32.mrb[0].mxu0
    %241 = vdwg.mxu0
    %v242 = vpack.c.bf16 %v169, %v164
    %v243 = vpack.c.bf16 %v179, %v174
    %v244 = vpack.c.bf16 %v189, %v184
    %v245 = vpack.c.bf16 %v199, %v194
    %v246 = vpack.c.bf16 %v209, %v204
    %v247 = vpack.c.bf16 %v219, %v214
    %v248 = vpack.c.bf16 %v229, %v224
    %v249 = vpack.c.bf16 %v239, %v234
    %v258 = vunpack.c.l.b16 %v242
    %v259 = vunpack.c.h.b16 %v242
    %v260 = vunpack.c.l.b16 %v243
    %v261 = vunpack.c.h.b16 %v243
    %v262 = vunpack.c.l.b16 %v244
    %v263 = vunpack.c.h.b16 %v244
    %v264 = vunpack.c.l.b16 %v245
    %v265 = vunpack.c.h.b16 %v245
    %v266 = vunpack.c.l.b16 %v246
    %v267 = vunpack.c.h.b16 %v246
    %v268 = vunpack.c.l.b16 %v247
    %v269 = vunpack.c.h.b16 %v247
    %v270 = vunpack.c.l.b16 %v248
    %v271 = vunpack.c.h.b16 %v248
    %v272 = vunpack.c.l.b16 %v249
    %v273 = vunpack.c.h.b16 %v249
    %v274 = vpack.c.b16 %v258, %v258
    %v275 = vpack.c.b16 %v259, %v259
    %v276 = vpack.c.b16 %v260, %v260
    %v277 = vpack.c.b16 %v261, %v261
    %v278 = vpack.c.b16 %v262, %v262
    %v279 = vpack.c.b16 %v263, %v263
    %v280 = vpack.c.b16 %v264, %v264
    %v281 = vpack.c.b16 %v265, %v265
    %v282 = vpack.c.b16 %v266, %v266
    %v283 = vpack.c.b16 %v267, %v267
    %v284 = vpack.c.b16 %v268, %v268
    %v285 = vpack.c.b16 %v269, %v269
    %v286 = vpack.c.b16 %v270, %v270
    %v287 = vpack.c.b16 %v271, %v271
    %v288 = vpack.c.b16 %v272, %v272
    %v289 = vpack.c.b16 %v273, %v273
    %vm306 = vcmask 60416
    %307 = vst.msk [vmem:[%s2] sm:$0xf] %vm306, %v274
    %308 = vst.msk [vmem:[%s2 + $0x4] sm:$0xf] %vm306, %v275
    %309 = vst.msk [vmem:[%s2 + $0x8] sm:$0xf] %vm306, %v276
    %310 = vst.msk [vmem:[%s2 + $0xc] sm:$0xf] %vm306, %v277
    %311 = vst.msk [vmem:[%s2 + $0x10] sm:$0xf] %vm306, %v278
    %312 = vst.msk [vmem:[%s2 + $0x14] sm:$0xf] %vm306, %v279
    %313 = vst.msk [vmem:[%s2 + $0x18] sm:$0xf] %vm306, %v280
    %314 = vst.msk [vmem:[%s2 + $0x1c] sm:$0xf] %vm306, %v281
    %315 = vst.msk [vmem:[%s2 + $0x20] sm:$0xf] %vm306, %v282
    %316 = vst.msk [vmem:[%s2 + $0x24] sm:$0xf] %vm306, %v283
    %317 = vst.msk [vmem:[%s2 + $0x28] sm:$0xf] %vm306, %v284
    %318 = vst.msk [vmem:[%s2 + $0x2c] sm:$0xf] %vm306, %v285
    %319 = vst.msk [vmem:[%s2 + $0x30] sm:$0xf] %vm306, %v286
    %320 = vst.msk [vmem:[%s2 + $0x34] sm:$0xf] %vm306, %v287
    %321 = vst.msk [vmem:[%s2 + $0x38] sm:$0xf] %vm306, %v288
    %322 = vst.msk [vmem:[%s2 + $0x3c] sm:$0xf] %vm306, %v289
    %s323 = smul.u32 0, 128
    %s324 = ssub.s32 128, %s323
    %v325 = vlaneseq
    %v326 = vshrl.u32 %v325, 7
    %v327 = vadd.s32 %v326, 8
    %v328 = vadd.s32 %v326, 16
    %v329 = vadd.s32 %v326, 24
    %v330 = vadd.s32 %v326, 32
    %v331 = vadd.s32 %v326, 40
    %v332 = vadd.s32 %v326, 48
    %v333 = vadd.s32 %v326, 56
    %v334 = vadd.s32 %v326, 64
    %v335 = vadd.s32 %v326, 72
    %v336 = vadd.s32 %v326, 80
    %v337 = vadd.s32 %v326, 88
    %v338 = vadd.s32 %v326, 96
    %v339 = vadd.s32 %v326, 104
    %v340 = vadd.s32 %v326, 112
    %v341 = vadd.s32 %v326, 120
    %v342 = vstv %s324
    %vm343 = vcmp.lt.s32.totalorder %v326, %v342
    %vm344 = vcmp.lt.s32.totalorder %v327, %v342
    %vm345 = vcmp.lt.s32.totalorder %v328, %v342
    %vm346 = vcmp.lt.s32.totalorder %v329, %v342
    %vm347 = vcmp.lt.s32.totalorder %v330, %v342
    %vm348 = vcmp.lt.s32.totalorder %v331, %v342
    %vm349 = vcmp.lt.s32.totalorder %v332, %v342
    %vm350 = vcmp.lt.s32.totalorder %v333, %v342
    %vm351 = vcmp.lt.s32.totalorder %v334, %v342
    %vm352 = vcmp.lt.s32.totalorder %v335, %v342
    %vm353 = vcmp.lt.s32.totalorder %v336, %v342
    %vm354 = vcmp.lt.s32.totalorder %v337, %v342
    %vm355 = vcmp.lt.s32.totalorder %v338, %v342
    %vm356 = vcmp.lt.s32.totalorder %v339, %v342
    %vm357 = vcmp.lt.s32.totalorder %v340, %v342
    %vm358 = vcmp.lt.s32.totalorder %v341, %v342
    %v359 = vsel %vm343, %v164, 0.0
    %v360 = vsel %vm344, %v169, 0.0
    %v361 = vsel %vm345, %v174, 0.0
    %v362 = vsel %vm346, %v179, 0.0
    %v363 = vsel %vm347, %v184, 0.0
    %v364 = vsel %vm348, %v189, 0.0
    %v365 = vsel %vm349, %v194, 0.0
    %v366 = vsel %vm350, %v199, 0.0
    %v367 = vsel %vm351, %v204, 0.0
    %v368 = vsel %vm352, %v209, 0.0
    %v369 = vsel %vm353, %v214, 0.0
    %v370 = vsel %vm354, %v219, 0.0
    %v371 = vsel %vm355, %v224, 0.0
    %v372 = vsel %vm356, %v229, 0.0
    %v373 = vsel %vm357, %v234, 0.0
    %v374 = vsel %vm358, %v239, 0.0
    %vm375 = vcmask 64512
    %v376 = vsel %vm375, %v359, 0.0
    %v377 = vsel %vm375, %v360, 0.0
    %v378 = vadd.f32 %v376, %v377
    %v379 = vsel %vm375, %v361, 0.0
    %v380 = vadd.f32 %v378, %v379
    %v381 = vsel %vm375, %v362, 0.0
    %v382 = vadd.f32 %v380, %v381
    %v383 = vsel %vm375, %v363, 0.0
    %v384 = vadd.f32 %v382, %v383
    %v385 = vsel %vm375, %v364, 0.0
    %v386 = vadd.f32 %v384, %v385
    %v387 = vsel %vm375, %v365, 0.0
    %v388 = vadd.f32 %v386, %v387
    %v389 = vsel %vm375, %v366, 0.0
    %v390 = vadd.f32 %v388, %v389
    %v391 = vsel %vm375, %v367, 0.0
    %v392 = vadd.f32 %v390, %v391
    %v393 = vsel %vm375, %v368, 0.0
    %v394 = vadd.f32 %v392, %v393
    %v395 = vsel %vm375, %v369, 0.0
    %v396 = vadd.f32 %v394, %v395
    %v397 = vsel %vm375, %v370, 0.0
    %v398 = vadd.f32 %v396, %v397
    %v399 = vsel %vm375, %v371, 0.0
    %v400 = vadd.f32 %v398, %v399
    %v401 = vsel %vm375, %v372, 0.0
    %v402 = vadd.f32 %v400, %v401
    %v403 = vsel %vm375, %v373, 0.0
    %v404 = vadd.f32 %v402, %v403
    %v405 = vsel %vm375, %v374, 0.0
    %v406 = vadd.f32 %v404, %v405
    %v407 = vrot.slane %v406, 4
    %v408 = vadd.f32 %v406, %v407
    %v409 = vrot.slane %v408, 2
    %v410 = vadd.f32 %v408, %v409
    %v411 = vrot.slane %v410, 1
    %v412 = vadd.f32 %v410, %v411
    %v413 = vmul.f32 %v359, %v359
    %v414 = vmul.f32 %v360, %v360
    %v415 = vmul.f32 %v361, %v361
    %v416 = vmul.f32 %v362, %v362
    %v417 = vmul.f32 %v363, %v363
    %v418 = vmul.f32 %v364, %v364
    %v419 = vmul.f32 %v365, %v365
    %v420 = vmul.f32 %v366, %v366
    %v421 = vmul.f32 %v367, %v367
    %v422 = vmul.f32 %v368, %v368
    %v423 = vmul.f32 %v369, %v369
    %v424 = vmul.f32 %v370, %v370
    %v425 = vmul.f32 %v371, %v371
    %v426 = vmul.f32 %v372, %v372
    %v427 = vmul.f32 %v373, %v373
    %v428 = vmul.f32 %v374, %v374
    %v429 = vsel %vm375, %v413, 0.0
    %v430 = vsel %vm375, %v414, 0.0
    %v431 = vadd.f32 %v429, %v430
    %v432 = vsel %vm375, %v415, 0.0
    %v433 = vadd.f32 %v431, %v432
    %v434 = vsel %vm375, %v416, 0.0
    %v435 = vadd.f32 %v433, %v434
    %v436 = vsel %vm375, %v417, 0.0
    %v437 = vadd.f32 %v435, %v436
    %v438 = vsel %vm375, %v418, 0.0
    %v439 = vadd.f32 %v437, %v438
    %v440 = vsel %vm375, %v419, 0.0
    %v441 = vadd.f32 %v439, %v440
    %v442 = vsel %vm375, %v420, 0.0
    %v443 = vadd.f32 %v441, %v442
    %v444 = vsel %vm375, %v421, 0.0
    %v445 = vadd.f32 %v443, %v444
    %v446 = vsel %vm375, %v422, 0.0
    %v447 = vadd.f32 %v445, %v446
    %v448 = vsel %vm375, %v423, 0.0
    %v449 = vadd.f32 %v447, %v448
    %v450 = vsel %vm375, %v424, 0.0
    %v451 = vadd.f32 %v449, %v450
    %v452 = vsel %vm375, %v425, 0.0
    %v453 = vadd.f32 %v451, %v452
    %v454 = vsel %vm375, %v426, 0.0
    %v455 = vadd.f32 %v453, %v454
    %v456 = vsel %vm375, %v427, 0.0
    %v457 = vadd.f32 %v455, %v456
    %v458 = vsel %vm375, %v428, 0.0
    %v459 = vadd.f32 %v457, %v458
    %v460 = vrot.slane %v459, 4
    %v461 = vadd.f32 %v459, %v460
    %v462 = vrot.slane %v461, 2
    %v463 = vadd.f32 %v461, %v462
    %v464 = vrot.slane %v463, 1
    %v465 = vadd.f32 %v463, %v464
    %vm466 = vcmp.eq.s32.totalorder %v326, 0
    %vm467 = vcmp.eq.s32.totalorder %v326, 1
    %v468 = vsel %vm467, %v465, 0.0
    %v469 = vsel %vm466, %v412, %v468
    %470 = vst.msk [vmem:[#allocation2] sm:$0xff] %vm375, %v469
    // Predicated region
    $region10: #{tpu_custom_call.1} parent=1 // pred_check
      _
    $region11: #{tpu_custom_call.1} parent=1 // pred_check_branch
      %472 = sbr.rel (0) target = $region13
    $region12: #{tpu_custom_call.1} parent=1 // pred_region
      _
    $region13: #{tpu_custom_call.1} parent=1 // pred_fallthru
      _
    // Predicated region
    $region14: #{tpu_custom_call.1} parent=1 // pred_check
      _
    $region15: #{tpu_custom_call.1} parent=1 // pred_check_branch
      %474 = sbr.rel (0) target = $region17
    $region16: #{tpu_custom_call.1} parent=1 // pred_region
      %s476 = ssub.s32 128, 128
      %477 = vsyncadd [#allocation3], %s476
      %s479 = sshll.u32 [#allocation2], 4
      %s480 = int_to_ptr.vmem [resolvable:$true] %s479
      %482 = dma.vmem_to_hbm [thread:$0]  %s480, 128, %s3, [#allocation3]
    $region17: #{tpu_custom_call.1} parent=1 // pred_fallthru
      _
    // Predicated region
    $region18: #{tpu_custom_call.1} parent=1 // pred_check
      _
    $region19: #{tpu_custom_call.1} parent=1 // pred_check_branch
      %484 = sbr.rel (0) target = $region21
    $region20: #{tpu_custom_call.1} parent=1 // pred_region
      _
    $region21: #{tpu_custom_call.1} parent=1 // pred_fallthru
      _
    // Predicated region
    $region22: #{tpu_custom_call.1} parent=1 // pred_check
      _
    $region23: #{tpu_custom_call.1} parent=1 // pred_check_branch
      %486 = sbr.rel (0) target = $region25
    $region24: #{tpu_custom_call.1} parent=1 // pred_region
      %487 = dma.done [#allocation3], 128
    $region25: #{tpu_custom_call.1} parent=1 // pred_fallthru
      _
    %488 = vsyncpa [#allocation3], 1

</llo_original>
